<compile_context>
chip_gen: v7x
topology: tpu7x:2x2x1
jax: 0.10.0
libtpu: 0.0.40
codegen_flags: <defaults>
</compile_context>

<pallas_src>
import math

import jax
import jax.numpy as jnp
from jax.experimental import pallas as pl
from jax.experimental.pallas import tpu as pltpu


# --------------------------------------------------------------------------------------
# Parameter / table construction (plain JAX "glue")
# --------------------------------------------------------------------------------------
def make_token_embedding(key, d_model):
    """TokenEmbedding(4, d_model): nn.Embedding(4, d_model, padding_idx=1).
    Rows: 0=cls, 1=bos (padding row -> zeroed), 2=eos, 3=pad."""
    w = jax.random.normal(key, (4, d_model), dtype=jnp.float32)
    w = w.at[1].set(0.0)
    return w


def make_positional_encoding(d_model, max_len):
    """Sinusoidal positional encoding table [max_len, d_model]."""
    pos = jnp.arange(max_len, dtype=jnp.float32)[:, None]
    two_i = jnp.arange(0, d_model, 2, dtype=jnp.float32)[None, :]
    angle = pos / jnp.power(10000.0, two_i / d_model)
    enc = jnp.zeros((max_len, d_model), dtype=jnp.float32)
    enc = enc.at[:, 0::2].set(jnp.sin(angle))
    enc = enc.at[:, 1::2].set(jnp.cos(angle))
    return enc


# --------------------------------------------------------------------------------------
# Tile-size selection helpers (trace-time Python only)
# --------------------------------------------------------------------------------------
def _pick_seq_tile(S, row_bytes, target):
    """Largest multiple-of-8 divisor of S whose (Ts, D) tile fits `target` bytes (else S)."""
    if S * row_bytes <= target or S <= 8:
        return S
    best = None
    for d in range(8, S, 8):
        if S % d == 0 and d * row_bytes <= target:
            best = d
    return best if best is not None else S


def _pick_batch_block(B, slab_bytes, target):
    """Largest divisor of B whose per-step (Bb, S+1, D) slab fits `target` bytes (>= 1)."""
    best = 1
    for d in range(1, B + 1):
        if B % d == 0 and d * slab_bytes <= target:
            best = d
    return best


# --------------------------------------------------------------------------------------
# Kernel
# --------------------------------------------------------------------------------------
def _make_kernel(*, ifdecode, add_pos, scale, ts, ns, bb, d, out_dtype):
    def kernel(*refs):
        if ifdecode:
            if add_pos:
                loc_ref, prefix_ref, pos_ref, out_ref = refs
            else:
                loc_ref, prefix_ref, out_ref = refs
                pos_ref = None
            flags_ref = eos_ref = None
        else:
            if add_pos:
                loc_ref, flags_ref, eos_ref, prefix_ref, pos_ref, out_ref = refs
            else:
                loc_ref, flags_ref, eos_ref, prefix_ref, out_ref = refs
                pos_ref = None

        j = pl.program_id(1)  # sequence-tile index (output slab is resident across j)

        body = loc_ref[...].astype(jnp.float32) * scale              # (bb, ts, d)
        if not ifdecode:
            flg = flags_ref[...]                                     # (bb, ts, 1) int32
            eos = eos_ref[...]                                       # (1, d), pre-scaled
            body = jnp.where(flg == 3, eos[None, :, :], body)
        if add_pos:
            body = body + pos_ref[...][None, :, :]                   # (ts, d), sublane-aligned
        body = body.astype(out_dtype)

        # Body rows land at out rows [1 + j*ts, 1 + (j+1)*ts); the +1 prefix offset is
        # inherent to the op and is eaten here as a (DMA-hidden) shifted store.
        if ns == 1:
            out_ref[:, 1:1 + ts, :] = body
        else:
            out_ref[:, pl.ds(1 + j * ts, ts), :] = body

        @pl.when(j == 0)
        def _():
            pref = prefix_ref[...].astype(out_dtype)                 # (1, d), pre-scaled (+pos[0])
            out_ref[:, 0:1, :] = jnp.broadcast_to(pref[None, :, :], (bb, 1, d))

    return kernel


# --------------------------------------------------------------------------------------
# Wrapper
# --------------------------------------------------------------------------------------
def transformer_embedding_with_loc(location_embedding, loc_flags, tok_emb_table,
                                   pos_enc_table, *, ifdecode=False, add_pos=True,
                                   seq_tile=None, batch_block=None):
    """
    location_embedding: [B, S, D]
    loc_flags:          [B, S] int (used only when ifdecode=False; 3 marks an EOS slot)
    tok_emb_table:      [4, D]  (0=cls, 1=bos, 2=eos, 3=pad)
    pos_enc_table:      [max_len, D] with max_len >= S + 1
    returns:            [B, S+1, D]
    """
    B, S, D = location_embedding.shape
    assert pos_enc_table.shape[0] >= S + 1 and pos_enc_table.shape[1] == D
    scale = float(math.sqrt(D))
    in_dtype = location_embedding.dtype
    out_dtype = in_dtype

    # ---- batch-invariant rows precomputed once in the wrapper (hoisted prefix/eos math) ----
    tok = tok_emb_table.astype(jnp.float32)
    prefix_row = (tok[1] if ifdecode else tok[0])[None, :] * scale           # (1, D)
    if add_pos:
        prefix_row = prefix_row + pos_enc_table[0][None, :].astype(jnp.float32)
    eos_row = tok[2][None, :] * scale                                        # (1, D)
    # Pre-slice so the per-tile positional read is sublane-aligned with the location rows.
    pos_body = pos_enc_table[1:S + 1].astype(jnp.float32) if add_pos else None   # (S, D)

    # ---- adaptive tiling: ~0.5-2 MiB streamed per grid step, VMEM footprint capped ----
    itemsize = jnp.dtype(in_dtype).itemsize
    target = 2 << 20  # ~2 MiB per streamed block
    if seq_tile is None:
        ts = _pick_seq_tile(S, D * itemsize, target)
    else:
        ts = int(seq_tile)
        assert S % ts == 0 and (ts % 8 == 0 or ts == S), "seq_tile must divide S and be %8"
    ns = S // ts

    if batch_block is None:
        bb = _pick_batch_block(B, (S + 1) * D * itemsize, target) if ns == 1 else 1
    else:
        bb = int(batch_block)
        assert B % bb == 0, "batch_block must divide B"
    nb = B // bb

    # ---- VMEM budget: resident output slab + double-buffered streamed tiles ----
    out_itemsize = jnp.dtype(out_dtype).itemsize
    vmem_est = (2 * bb * (S + 1) * D * out_itemsize                 # output slab (2 bufs, conservative)
                + 2 * bb * ts * D * itemsize                        # streamed location tiles
                + (0 if ifdecode else 2 * bb * ts * 128 * 4)        # lane-padded flags tiles
                + (2 * ts * D * 4 if add_pos else 0)                # positional tiles
                + 4 * 8 * D * 4)                                    # prefix / eos rows (sublane-padded)
    vmem_limit_bytes = int(min(64 << 20, max((vmem_est * 5) // 4 + (2 << 20), 16 << 20)))

    # ---- specs ----
    loc_spec = pl.BlockSpec((bb, ts, D), lambda i, j: (i, j, 0))
    out_spec = pl.BlockSpec((bb, S + 1, D), lambda i, j: (i, 0, 0))     # resident across j
    row_spec = pl.BlockSpec((1, D), lambda i, j: (0, 0))                # tiny constant rows
    pos_spec = pl.BlockSpec((ts, D), lambda i, j: (j, 0))
    flags_spec = pl.BlockSpec((bb, ts, 1), lambda i, j: (i, j, 0))

    if ifdecode:
        in_specs = [loc_spec, row_spec] + ([pos_spec] if add_pos else [])
        args = (location_embedding, prefix_row) + ((pos_body,) if add_pos else ())
    else:
        flags = loc_flags.astype(jnp.int32).reshape(B, S, 1)
        in_specs = [loc_spec, flags_spec, row_spec, row_spec] + ([pos_spec] if add_pos else [])
        args = (location_embedding, flags, eos_row, prefix_row) + ((pos_body,) if add_pos else ())

    kernel = _make_kernel(ifdecode=ifdecode, add_pos=add_pos, scale=scale,
                          ts=ts, ns=ns, bb=bb, d=D, out_dtype=out_dtype)

    return pl.pallas_call(
        kernel,
        grid_spec=pl.GridSpec(grid=(nb, ns), in_specs=in_specs, out_specs=out_spec),
        out_shape=jax.ShapeDtypeStruct((B, S + 1, D), out_dtype),
        compiler_params=pltpu.CompilerParams(
            dimension_semantics=("parallel", "arbitrary"),  # batch parallel; seq-tile revisits output
            vmem_limit_bytes=vmem_limit_bytes,
        ),
    )(*args)


# --------------------------------------------------------------------------------------
# Pure-JAX reference for correctness checks
# --------------------------------------------------------------------------------------
def transformer_embedding_with_loc_ref(location_embedding, loc_flags, tok_emb_table,
                                       pos_enc_table, *, ifdecode=False, add_pos=True):
    B, S, D = location_embedding.shape
    scale = math.sqrt(D)
    if not ifdecode:
        eos = tok_emb_table[2]
        body = jnp.where((loc_flags == 3)[..., None], eos[None, None, :], location_embedding)
        prefix = jnp.broadcast_to(tok_emb_table[0][None, None, :], (B, 1, D))
    else:
        body = location_embedding
        prefix = jnp.broadcast_to(tok_emb_table[1][None, None, :], (B, 1, D))
    emb = jnp.concatenate([prefix, body], axis=1) * scale
    if add_pos:
        emb = emb + pos_enc_table[: S + 1][None]
    return emb  # dropout (eval) = identity


if __name__ == "__main__":
    d_model = 128          # lane-dense D
    max_len = 128
    drop_prob = 0.1        # eval mode -> identity

    key = jax.random.PRNGKey(0)
    k_emb, k_loc, k_flag, k_loc2, k_flag2 = jax.random.split(key, 5)

    tok_emb_table = make_token_embedding(k_emb, d_model)
    pos_enc_table = make_positional_encoding(d_model, max_len)

    # --- small shapes: single grid step, batch-blocked path ---
    B, S = 2, 8
    loc = jax.random.normal(k_loc, (B, S, d_model), dtype=jnp.float32)
    flags = jnp.where(jax.random.uniform(k_flag, (B, S)) > 0.7, 3, 0).astype(jnp.int32)

    out_enc = jax.block_until_ready(transformer_embedding_with_loc(
        loc, flags, tok_emb_table, pos_enc_table, ifdecode=False, add_pos=True))
    ref_enc = transformer_embedding_with_loc_ref(
        loc, flags, tok_emb_table, pos_enc_table, ifdecode=False, add_pos=True)
    assert out_enc.shape == (B, S + 1, d_model), out_enc.shape
    assert jnp.allclose(out_enc, ref_enc, atol=1e-5, rtol=1e-5), "encoder mismatch vs reference"

    out_dec = jax.block_until_ready(transformer_embedding_with_loc(
        loc, flags, tok_emb_table, pos_enc_table, ifdecode=True, add_pos=True))
    ref_dec = transformer_embedding_with_loc_ref(
        loc, flags, tok_emb_table, pos_enc_table, ifdecode=True, add_pos=True)
    assert jnp.allclose(out_dec, ref_dec, atol=1e-5, rtol=1e-5), "decoder mismatch vs reference"

    out_np = jax.block_until_ready(transformer_embedding_with_loc(
        loc, flags, tok_emb_table, pos_enc_table, ifdecode=False, add_pos=False))
    ref_np = transformer_embedding_with_loc_ref(
        loc, flags, tok_emb_table, pos_enc_table, ifdecode=False, add_pos=False)
    assert jnp.allclose(out_np, ref_np, atol=1e-5, rtol=1e-5), "no-pos mismatch vs reference"

    # --- exercise the sequence-tiled (resident-output) path with forced small tiles ---
    B2, S2 = 2, 64
    loc2 = jax.random.normal(k_loc2, (B2, S2, d_model), dtype=jnp.float32)
    flags2 = jnp.where(jax.random.uniform(k_flag2, (B2, S2)) > 0.7, 3, 0).astype(jnp.int32)
    out_t = jax.block_until_ready(transformer_embedding_with_loc(
        loc2, flags2, tok_emb_table, pos_enc_table, ifdecode=False, add_pos=True,
        seq_tile=16, batch_block=1))
    ref_t = transformer_embedding_with_loc_ref(
        loc2, flags2, tok_emb_table, pos_enc_table, ifdecode=False, add_pos=True)
    assert jnp.allclose(out_t, ref_t, atol=1e-5, rtol=1e-5), "tiled-path mismatch vs reference"

    print("KERNEL_OK")
</pallas_src>

<mosaic_0001>
module attributes {stable_mosaic.version = 11 : i64} {
  func.func @kernel(%arg0: i32, %arg1: i32, %arg2: memref<2x8x128xf32, #tpu.memory_space<vmem>>, %arg3: memref<2x8x1xi32, #tpu.memory_space<vmem>>, %arg4: memref<1x128xf32, #tpu.memory_space<vmem>>, %arg5: memref<1x128xf32, #tpu.memory_space<vmem>>, %arg6: memref<8x128xf32, #tpu.memory_space<vmem>>, %arg7: memref<2x9x128xf32, #tpu.memory_space<vmem>>) attributes {dimension_semantics = [#tpu.dimension_semantics<parallel>, #tpu.dimension_semantics<arbitrary>], iteration_bounds = array<i64: 1, 1>, scalar_prefetch = 0 : i64, scratch_operands = 0 : i64, tpu.core_type = #tpu.core_type<tc>, window_params = [{transform_indices = @transform_0, window_bounds = array<i64: 2, 8, 128>}, {transform_indices = @transform_1, window_bounds = array<i64: 2, 8, 1>}, {pipeline_mode = #tpu.pipeline_mode<synchronous>, transform_indices = @transform_2, window_bounds = array<i64: 1, 128>}, {pipeline_mode = #tpu.pipeline_mode<synchronous>, transform_indices = @transform_3, window_bounds = array<i64: 1, 128>}, {transform_indices = @transform_4, window_bounds = array<i64: 8, 128>}, {transform_indices = @transform_5, window_bounds = array<i64: 2, 9, 128>}]} {
    %c0 = arith.constant 0 : index
    %c0_0 = arith.constant 0 : index
    %c0_1 = arith.constant 0 : index
    %0 = vector.load %arg2[%c0, %c0_0, %c0_1] : memref<2x8x128xf32, #tpu.memory_space<vmem>>, vector<2x8x128xf32>
    %cst = arith.constant 11.3137083 : f32
    %1 = vector.broadcast %cst : f32 to vector<2x8x128xf32>
    %2 = arith.mulf %0, %1 : vector<2x8x128xf32>
    %c0_2 = arith.constant 0 : index
    %c0_3 = arith.constant 0 : index
    %c0_4 = arith.constant 0 : index
    %3 = vector.load %arg3[%c0_2, %c0_3, %c0_4] : memref<2x8x1xi32, #tpu.memory_space<vmem>>, vector<2x8x1xi32>
    %c0_5 = arith.constant 0 : index
    %c0_6 = arith.constant 0 : index
    %4 = vector.load %arg4[%c0_5, %c0_6] : memref<1x128xf32, #tpu.memory_space<vmem>>, vector<1x128xf32>
    %c3_i32 = arith.constant 3 : i32
    %5 = vector.broadcast %c3_i32 : i32 to vector<2x8x1xi32>
    %6 = arith.cmpi eq, %3, %5 : vector<2x8x1xi32>
    %7 = vector.shape_cast %4 : vector<1x128xf32> to vector<1x1x128xf32>
    %8 = vector.shape_cast %6 : vector<2x8x1xi1> to vector<2x8x1xi1>
    %9 = vector.broadcast %8 : vector<2x8x1xi1> to vector<2x8x128xi1>
    %10 = vector.shape_cast %7 : vector<1x1x128xf32> to vector<1x1x128xf32>
    %11 = vector.broadcast %10 : vector<1x1x128xf32> to vector<2x8x128xf32>
    %12 = arith.select %9, %11, %2 : vector<2x8x128xi1>, vector<2x8x128xf32>
    %c0_7 = arith.constant 0 : index
    %c0_8 = arith.constant 0 : index
    %13 = vector.load %arg6[%c0_7, %c0_8] : memref<8x128xf32, #tpu.memory_space<vmem>>, vector<8x128xf32>
    %14 = vector.shape_cast %13 : vector<8x128xf32> to vector<1x8x128xf32>
    %15 = vector.broadcast %14 : vector<1x8x128xf32> to vector<2x8x128xf32>
    %16 = arith.addf %12, %15 : vector<2x8x128xf32>
    %c0_9 = arith.constant 0 : index
    %c1 = arith.constant 1 : index
    %c0_10 = arith.constant 0 : index
    %17 = vector.load %arg7[%c0_9, %c1, %c0_10] : memref<2x9x128xf32, #tpu.memory_space<vmem>>, vector<2x8x128xf32>
    tpu.vector_store %arg7[%c0_9, %c1, %c0_10], %16 {strides = array<i32>} : memref<2x9x128xf32, #tpu.memory_space<vmem>>, vector<2x8x128xf32>,
    %c0_i32 = arith.constant 0 : i32
    %18 = arith.cmpi eq, %arg1, %c0_i32 : i32
    %19 = arith.extui %18 : i1 to i32
    %c0_i32_11 = arith.constant 0 : i32
    %20 = arith.cmpi ne, %19, %c0_i32_11 : i32
    scf.if %20 {
      %c0_12 = arith.constant 0 : index
      %c0_13 = arith.constant 0 : index
      %21 = vector.load %arg5[%c0_12, %c0_13] : memref<1x128xf32, #tpu.memory_space<vmem>>, vector<1x128xf32>
      %22 = vector.shape_cast %21 : vector<1x128xf32> to vector<1x1x128xf32>
      %23 = vector.shape_cast %22 : vector<1x1x128xf32> to vector<1x1x128xf32>
      %24 = vector.broadcast %23 : vector<1x1x128xf32> to vector<2x1x128xf32>
      %c0_14 = arith.constant 0 : index
      %c0_15 = arith.constant 0 : index
      %c0_16 = arith.constant 0 : index
      %25 = vector.load %arg7[%c0_14, %c0_15, %c0_16] : memref<2x9x128xf32, #tpu.memory_space<vmem>>, vector<2x1x128xf32>
      tpu.vector_store %arg7[%c0_14, %c0_15, %c0_16], %24 {strides = array<i32>} : memref<2x9x128xf32, #tpu.memory_space<vmem>>, vector<2x1x128xf32>,
    } else {
    }
    return
  }
  func.func @transform_0(%arg0: i32, %arg1: i32) -> (i32, i32, i32) {
    %c0_i32 = arith.constant 0 : i32
    %c0_i32_0 = arith.constant 0 : i32
    return %arg0, %arg1, %c0_i32 : i32, i32, i32
  }
  func.func @transform_1(%arg0: i32, %arg1: i32) -> (i32, i32, i32) {
    %c0_i32 = arith.constant 0 : i32
    %c0_i32_0 = arith.constant 0 : i32
    return %arg0, %arg1, %c0_i32 : i32, i32, i32
  }
  func.func @transform_2(%arg0: i32, %arg1: i32) -> (i32, i32) {
    %c0_i32 = arith.constant 0 : i32
    %c0_i32_0 = arith.constant 0 : i32
    %c0_i32_1 = arith.constant 0 : i32
    return %c0_i32, %c0_i32_0 : i32, i32
  }
  func.func @transform_3(%arg0: i32, %arg1: i32) -> (i32, i32) {
    %c0_i32 = arith.constant 0 : i32
    %c0_i32_0 = arith.constant 0 : i32
    %c0_i32_1 = arith.constant 0 : i32
    return %c0_i32, %c0_i32_0 : i32, i32
  }
  func.func @transform_4(%arg0: i32, %arg1: i32) -> (i32, i32) {
    %c0_i32 = arith.constant 0 : i32
    %c0_i32_0 = arith.constant 0 : i32
    return %arg1, %c0_i32 : i32, i32
  }
  func.func @transform_5(%arg0: i32, %arg1: i32) -> (i32, i32, i32) {
    %c0_i32 = arith.constant 0 : i32
    %c0_i32_0 = arith.constant 0 : i32
    %c0_i32_1 = arith.constant 0 : i32
    return %arg0, %c0_i32, %c0_i32_0 : i32, i32, i32
  }
}

</mosaic_0001>

<llo_original>
// kernel: tpu_custom_call.1
$region0: #{tpu_custom_call.1}
  #allocation0 [shape = 'u32[]', space=smem, size = 0x4, offset = 0x4, fixed_abs, tag = 'smem constant byte address 0x4 - core index']
  #allocation1 [shape = 'u32[144,128]{1,0:T(1,128)}', space=vmem, size = 0x12000, scoped, tag = 'internal scratch']
  %s0 = inlined_call_operand.vmem [shape: f32[2,8,128], index: 0, kind: input, shape index: {}]
  %s1 = inlined_call_operand.vmem [shape: s32[2,8,1], index: 1, kind: input, shape index: {}]
  %s2 = inlined_call_operand.vmem [shape: f32[1,128], index: 2, kind: input, shape index: {}]
  %s3 = inlined_call_operand.vmem [shape: f32[1,128], index: 3, kind: input, shape index: {}]
  %s4 = inlined_call_operand.vmem [shape: f32[8,128], index: 4, kind: input, shape index: {}]
  %s5 = inlined_call_operand.vmem [shape: f32[2,9,128], index: 5, kind: output, shape index: {}]
  %s6 = sld [smem:[#allocation0]]
  $region34: #{tpu_custom_call.1} parent=0
    _
  %s8 = ssub.s32 1, %s6
  %s9 = scalar_select 0, %s8, %s6
  // Predicated region
  $region2: #{tpu_custom_call.1} parent=0 // pred_check
    _
  $region3: #{tpu_custom_call.1} parent=0 // pred_check_branch
    %11 = sbr.rel (0) target = $region5
  $region4: #{tpu_custom_call.1} parent=0 // pred_region
    _
  $region5: #{tpu_custom_call.1} parent=0 // pred_fallthru
    _
  // Predicated region
  $region6: #{tpu_custom_call.1} parent=0 // pred_check
    _
  $region7: #{tpu_custom_call.1} parent=0 // pred_check_branch
    %13 = sbr.rel (0) target = $region9
  $region8: #{tpu_custom_call.1} parent=0 // pred_region
    _
  $region9: #{tpu_custom_call.1} parent=0 // pred_fallthru
    _
  // Predicated region
  $region10: #{tpu_custom_call.1} parent=0 // pred_check
    _
  $region11: #{tpu_custom_call.1} parent=0 // pred_check_branch
    %15 = sbr.rel (0) target = $region13
  $region12: #{tpu_custom_call.1} parent=0 // pred_region
    _
  $region13: #{tpu_custom_call.1} parent=0 // pred_fallthru
    _
  // Predicated region
  $region14: #{tpu_custom_call.1} parent=0 // pred_check
    _
  $region15: #{tpu_custom_call.1} parent=0 // pred_check_branch
    %17 = sbr.rel (0) target = $region17
  $region16: #{tpu_custom_call.1} parent=0 // pred_region
    _
  $region17: #{tpu_custom_call.1} parent=0 // pred_fallthru
    _
  // Predicated region
  $region18: #{tpu_custom_call.1} parent=0 // pred_check
    _
  $region19: #{tpu_custom_call.1} parent=0 // pred_check_branch
    %19 = sbr.rel (0) target = $region21
  $region20: #{tpu_custom_call.1} parent=0 // pred_region
    _
  $region21: #{tpu_custom_call.1} parent=0 // pred_fallthru
    _
  %v20 = vld [vmem:[%s0] sm:$0xff]
  %v21 = vld [vmem:[%s0 + $0x8] sm:$0xff]
  %v22 = vmul.f32 %v20, 11.313708
  %v23 = vmul.f32 %v21, 11.313708
  %v24 = vld [vmem:[%s1] sm:$0xff]
  %v25 = vld [vmem:[%s1 + $0x8] sm:$0xff]
  %v26 = vld [vmem:[%s2] sm:$0x1]
  %vm27 = vcmp.eq.s32.totalorder %v24, 3
  %vm28 = vcmp.eq.s32.totalorder %v25, 3
  %v29 = vsel %vm27, 1, 0
  %v30 = vsel %vm28, 1, 0
  %31 = vset.pattern.permute.xlu0 0
  %32 = vperm.xlu0 %31, %v29
  %v33 = vpop.permute.xlu0 %32
  %34 = vset.pattern.permute.xlu0 0
  %35 = vperm.xlu0 %34, %v30
  %v36 = vpop.permute.xlu0 %35
  %vm37 = vcmp.eq.s32.totalorder %v33, 1
  %vm38 = vcmp.eq.s32.totalorder %v36, 1
  %v40 = vlaneseq
  %v41 = vshrl.u32 %v40, 7
  %v42 = vsub.s32 0, %v41
  %v43 = vrot.slane %v26, %v42
  %v45 = vsel %vm37, %v43, %v22
  %v46 = vsel %vm38, %v43, %v23
  %v47 = vld [vmem:[%s4] sm:$0xff]
  %v48 = vadd.f32 %v45, %v47
  %v49 = vadd.f32 %v46, %v47
  %50 = vst [vmem:[%s5 + $0x1] sm:$0xff] %v48
  %51 = vst [vmem:[%s5 + $0x11] sm:$0xff] %v49
  %p52 = scmp.eq.s32.totalorder 0, 0
  // Predicated region
  $region22: #{tpu_custom_call.1} parent=0 // pred_check
    %p53 = pneg %p52
  $region23: #{tpu_custom_call.1} parent=0 // pred_check_branch
    %55 = sbr.rel (%p53) target = $region25
  $region24: #{tpu_custom_call.1} parent=0 // pred_region
    %v56 = vld [vmem:[%s3] sm:$0x1]
    %57 = vst [vmem:[%s5] sm:$0x1] %v56
    %58 = vst [vmem:[%s5 + $0x10] sm:$0x1] %v56
  $region25: #{tpu_custom_call.1} parent=0 // pred_fallthru
    _
  // Predicated region
  $region26: #{tpu_custom_call.1} parent=0 // pred_check
    _
  $region27: #{tpu_custom_call.1} parent=0 // pred_check_branch
    %60 = sbr.rel (0) target = $region29
  $region28: #{tpu_custom_call.1} parent=0 // pred_region
    _
  $region29: #{tpu_custom_call.1} parent=0 // pred_fallthru
    _
  // Predicated region
  $region30: #{tpu_custom_call.1} parent=0 // pred_check
    _
  $region31: #{tpu_custom_call.1} parent=0 // pred_check_branch
    %62 = sbr.rel (0) target = $region33
  $region32: #{tpu_custom_call.1} parent=0 // pred_region
    _
  $region33: #{tpu_custom_call.1} parent=0 // pred_fallthru
    _

</llo_original>
